<compile_context>
chip_gen: v5e
topology: v5e:2x2
jax: 0.10.0
libtpu: 0.0.40
codegen_flags: <defaults>
</compile_context>

<pallas_src>
import math
import jax
import jax.numpy as jnp
from jax.experimental import pallas as pl
from jax.experimental.pallas import tpu as pltpu


def _round_up(a, b):
    return (a + b - 1) // b * b


def _embed_kernel(x_ref, w_ref, pe_ref, o_ref):
    # x_ref : [TB, L, C]    input tile (compute dtype, C on the lane axis)
    # w_ref : [C, 3*Dp]     fused per-tap projections [tap0 | tap1 | tap2]
    # pe_ref: [L, Dp]       sinusoidal positional table (compute dtype)
    # o_ref : [TB, L, Dp]   Dp = d_model padded to a multiple of 128 (lane-dense)
    tb, seq_len, c = x_ref.shape
    dp = o_ref.shape[-1]

    x = x_ref[...]

    # One MXU matmul for all three taps; f32 accumulation.
    p = jnp.dot(x.reshape(tb * seq_len, c), w_ref[...],
                preferred_element_type=jnp.float32)          # [TB*L, 3*Dp]
    p = p.reshape(tb, seq_len, 3 * dp)

    # Lane-aligned static slices (multiples of 128) -> no lane relayout.
    p_prev = p[..., 0 * dp:1 * dp]   # w[:, :, 0] . x[t]  -> contributes to y[t+1]
    p_self = p[..., 1 * dp:2 * dp]   # w[:, :, 1] . x[t]  -> contributes to y[t]
    p_next = p[..., 2 * dp:3 * dp]   # w[:, :, 2] . x[t]  -> contributes to y[t-1]

    # Circular conv via output shifts along the (sublane) sequence axis:
    #   y[t] = p_prev[t-1] + p_self[t] + p_next[t+1]
    acc = (jnp.roll(p_prev, 1, axis=1) + p_self + jnp.roll(p_next, -1, axis=1))

    acc = acc + pe_ref[...].astype(jnp.float32)[None]
    o_ref[...] = acc.astype(o_ref.dtype)                     # single cast on store


def _per_batch_vmem_bytes(L, C, Dp, in_elt, out_elt):
    """Conservative per-batch-row VMEM estimate (lane padding + intermediates)."""
    sub_in = 32 // in_elt            # sublane packing for the input dtype
    sub_out = 32 // out_elt
    x_row = _round_up(L, sub_in) * _round_up(C, 128) * in_elt          # x tile
    out_row = _round_up(L, sub_out) * Dp * out_elt                     # out tile
    # f32 in-kernel intermediates: matmul result [L, 3*Dp] + ~4 live [L, Dp]
    interm = L * 3 * Dp * 4 + 4 * L * Dp * 4
    return 2 * (x_row + out_row) + interm                    # x/out double-buffered


def data_embedding(x, conv_weight, pe, *,
                   out_dtype=jnp.bfloat16,
                   compute_dtype=jnp.bfloat16,
                   vmem_budget_bytes=None):
    """DataEmbedding forward (dropout = eval-mode identity).

    x          : [B, L, c_in]
    conv_weight: torch Conv1d layout [d_model, c_in, 3]
    pe         : [L, d_model]
    returns    : [B, L, d_model] in `out_dtype` (default bf16; pass
                 jnp.float32 for bit-closer PyTorch parity at 2x HBM cost).
    """
    B, L, C = x.shape
    D = conv_weight.shape[0]

    LANE = 128
    Dp = _round_up(D, LANE)          # lane-dense output stores

    # torch Conv1d weight [D, C, 3] -> [C, 3, D] -> pad D -> fused [C, 3*Dp].
    # Column block k*Dp+d multiplies tap k for output dim d.
    w = jnp.transpose(conv_weight, (1, 2, 0)).astype(compute_dtype)     # [C, 3, D]
    pe_c = pe.astype(compute_dtype)                                     # [L, D]
    if Dp != D:
        w = jnp.pad(w, ((0, 0), (0, 0), (0, Dp - D)))
        pe_c = jnp.pad(pe_c, ((0, 0), (0, Dp - D)))
    w_flat = w.reshape(C, 3 * Dp)

    x_c = x.astype(compute_dtype)

    # Per-generation VMEM sizing (v5e/v6e 128 MiB, v7x 64 MiB physical).
    try:
        vmem_cap = int(pltpu.get_tpu_info().vmem_capacity_bytes)
        if vmem_cap <= 0:
            raise ValueError
    except Exception:
        vmem_cap = 64 * 1024 * 1024          # conservative (v7x) fallback
    if vmem_budget_bytes is None:
        vmem_budget_bytes = vmem_cap // 2    # working-set target
    vmem_limit_bytes = min(vmem_cap * 3 // 4, 112 * 1024 * 1024)

    in_elt = jnp.dtype(compute_dtype).itemsize
    out_elt = jnp.dtype(out_dtype).itemsize

    # Resident (grid-constant) blocks: fused weights + pe, double-buffered.
    fixed = 2 * (_round_up(C, 32 // in_elt) * 3 * Dp * in_elt
                 + _round_up(L, 32 // in_elt) * Dp * in_elt)
    per_batch = _per_batch_vmem_bytes(L, C, Dp, in_elt, out_elt)

    tb = max(1, (vmem_budget_bytes - fixed) // max(per_batch, 1))
    tb = min(tb, B)
    if B >= 2:
        # Keep >= 2 parallel grid steps so v7x's two TensorCores both get work.
        tb = min(tb, pl.cdiv(B, 2))
    tb = int(max(1, tb))

    # Fixed TB, grid = cdiv(B, TB); pad the batch tail with zeros instead of
    # shrinking TB for ragged B. Padded rows are sliced off below.
    n_blocks = pl.cdiv(B, tb)
    Bp = n_blocks * tb
    if Bp != B:
        x_c = jnp.pad(x_c, ((0, Bp - B), (0, 0), (0, 0)))

    out = pl.pallas_call(
        _embed_kernel,
        out_shape=jax.ShapeDtypeStruct((Bp, L, Dp), out_dtype),
        grid_spec=pltpu.PrefetchScalarGridSpec(
            num_scalar_prefetch=0,
            grid=(n_blocks,),
            in_specs=[
                pl.BlockSpec((tb, L, C), lambda b: (b, 0, 0)),      # x tile
                pl.BlockSpec((C, 3 * Dp), lambda b: (0, 0)),        # fused taps
                pl.BlockSpec((L, Dp), lambda b: (0, 0)),            # pe table
            ],
            out_specs=pl.BlockSpec((tb, L, Dp), lambda b: (b, 0, 0)),
        ),
        compiler_params=pltpu.CompilerParams(
            dimension_semantics=("parallel",),
            vmem_limit_bytes=int(vmem_limit_bytes)),
    )(x_c, w_flat, pe_c)

    if Bp != B:
        out = out[:B]
    if Dp != D:
        out = out[..., :D]
    return out


def make_positional_embedding(L, d_model):
    position = jnp.arange(L, dtype=jnp.float32)[:, None]                    # [L,1]
    div_term = jnp.exp(jnp.arange(0, d_model, 2, dtype=jnp.float32)
                       * -(math.log(10000.0) / d_model))                    # [D/2]
    pe = jnp.zeros((L, d_model), dtype=jnp.float32)
    pe = pe.at[:, 0::2].set(jnp.sin(position * div_term))
    pe = pe.at[:, 1::2].set(jnp.cos(position * div_term))
    return pe


def reference(x, conv_weight, pe):
    """Pure-JAX f32 reference of the same forward pass (circular conv1d + pe)."""
    x_prev = jnp.roll(x, 1, axis=1)
    x_next = jnp.roll(x, -1, axis=1)
    w = jnp.transpose(conv_weight, (2, 1, 0))  # [3, C, D]
    out = (jnp.einsum("blc,cd->bld", x_prev, w[0])
           + jnp.einsum("blc,cd->bld", x, w[1])
           + jnp.einsum("blc,cd->bld", x_next, w[2]))
    return out + pe[None]


if __name__ == "__main__":
    B, L, c_in, d_model = 2, 16, 4, 32

    key = jax.random.PRNGKey(0)
    kx, kw = jax.random.split(key)

    x = jax.random.normal(kx, (B, L, c_in), dtype=jnp.float32)

    # Conv1d weight, torch layout [d_model, c_in, kernel=3],
    # kaiming_normal_(fan_in, leaky_relu): std = sqrt(2 / (c_in * 3))
    std = math.sqrt(2.0 / (c_in * 3))
    conv_weight = std * jax.random.normal(kw, (d_model, c_in, 3), dtype=jnp.float32)

    pe = make_positional_embedding(L, d_model)

    out = jax.block_until_ready(data_embedding(x, conv_weight, pe))
    ref = reference(x, conv_weight, pe)

    assert out.shape == (B, L, d_model)
    # bf16 compute + bf16 output -> relaxed tolerance vs the f32 reference.
    assert jnp.allclose(out.astype(jnp.float32), ref, atol=8e-2, rtol=4e-2), \
        "mismatch vs reference"

    print("KERNEL_OK")
</pallas_src>

<mosaic_0001>
module attributes {stable_mosaic.version = 11 : i64} {
  func.func @_embed_kernel(%arg0: i32, %arg1: memref<1x16x4xbf16, #tpu.memory_space<vmem>>, %arg2: memref<4x384xbf16, #tpu.memory_space<vmem>>, %arg3: memref<16x128xbf16, #tpu.memory_space<vmem>>, %arg4: memref<1x16x128xbf16, #tpu.memory_space<vmem>>) attributes {dimension_semantics = [#tpu.dimension_semantics<parallel>], iteration_bounds = array<i64: 2>, scalar_prefetch = 0 : i64, scratch_operands = 0 : i64, tpu.core_type = #tpu.core_type<tc>, window_params = [{transform_indices = @transform_0, window_bounds = array<i64: 1, 16, 4>}, {pipeline_mode = #tpu.pipeline_mode<synchronous>, transform_indices = @transform_1, window_bounds = array<i64: 4, 384>}, {pipeline_mode = #tpu.pipeline_mode<synchronous>, transform_indices = @transform_2, window_bounds = array<i64: 16, 128>}, {transform_indices = @transform_3, window_bounds = array<i64: 1, 16, 128>}]} {
    %c0 = arith.constant 0 : index
    %c0_0 = arith.constant 0 : index
    %c0_1 = arith.constant 0 : index
    %0 = vector.load %arg1[%c0, %c0_0, %c0_1] : memref<1x16x4xbf16, #tpu.memory_space<vmem>>, vector<1x16x4xbf16>
    %1 = vector.shape_cast %0 : vector<1x16x4xbf16> to vector<16x4xbf16>
    %c0_2 = arith.constant 0 : index
    %c0_3 = arith.constant 0 : index
    %2 = vector.load %arg2[%c0_2, %c0_3] : memref<4x384xbf16, #tpu.memory_space<vmem>>, vector<4x384xbf16>
    %cst = arith.constant dense<0.000000e+00> : vector<16x384xf32>
    %3 = tpu.matmul %1, %2, %cst {dimension_numbers = #tpu.dot_dimension_numbers<[1], [0], [0], [1], [0, 0, 1, 1], [], []>} : vector<16x4xbf16>, vector<4x384xbf16>, vector<16x384xf32> -> vector<16x384xf32>
    %4 = vector.shape_cast %3 : vector<16x384xf32> to vector<1x16x384xf32>
    %5 = vector.extract_strided_slice %4 {offsets = [0, 0, 0], sizes = [1, 16, 128], strides = [1, 1, 1]} : vector<1x16x384xf32> to vector<1x16x128xf32>
    %6 = vector.extract_strided_slice %4 {offsets = [0, 0, 128], sizes = [1, 16, 128], strides = [1, 1, 1]} : vector<1x16x384xf32> to vector<1x16x128xf32>
    %7 = vector.extract_strided_slice %4 {offsets = [0, 0, 256], sizes = [1, 16, 128], strides = [1, 1, 1]} : vector<1x16x384xf32> to vector<1x16x128xf32>
    %8 = vector.extract_strided_slice %5 {offsets = [0, 15, 0], sizes = [1, 1, 128], strides = [1, 1, 1]} : vector<1x16x128xf32> to vector<1x1x128xf32>
    %9 = vector.extract_strided_slice %5 {offsets = [0, 0, 0], sizes = [1, 15, 128], strides = [1, 1, 1]} : vector<1x16x128xf32> to vector<1x15x128xf32>
    %10 = tpu.concatenate %8, %9 in 1 : vector<1x1x128xf32>, vector<1x15x128xf32> -> vector<1x16x128xf32>
    %11 = arith.addf %10, %6 : vector<1x16x128xf32>
    %12 = vector.extract_strided_slice %7 {offsets = [0, 1, 0], sizes = [1, 15, 128], strides = [1, 1, 1]} : vector<1x16x128xf32> to vector<1x15x128xf32>
    %13 = vector.extract_strided_slice %7 {offsets = [0, 0, 0], sizes = [1, 1, 128], strides = [1, 1, 1]} : vector<1x16x128xf32> to vector<1x1x128xf32>
    %14 = tpu.concatenate %12, %13 in 1 : vector<1x15x128xf32>, vector<1x1x128xf32> -> vector<1x16x128xf32>
    %15 = arith.addf %11, %14 : vector<1x16x128xf32>
    %c0_4 = arith.constant 0 : index
    %c0_5 = arith.constant 0 : index
    %16 = vector.load %arg3[%c0_4, %c0_5] : memref<16x128xbf16, #tpu.memory_space<vmem>>, vector<16x128xbf16>
    %17 = arith.extf %16 : vector<16x128xbf16> to vector<16x128xf32>
    %18 = vector.shape_cast %17 : vector<16x128xf32> to vector<1x16x128xf32>
    %19 = arith.addf %15, %18 : vector<1x16x128xf32>
    %20 = arith.truncf %19 : vector<1x16x128xf32> to vector<1x16x128xbf16>
    %c0_6 = arith.constant 0 : index
    %c0_7 = arith.constant 0 : index
    %c0_8 = arith.constant 0 : index
    %21 = vector.load %arg4[%c0_6, %c0_7, %c0_8] : memref<1x16x128xbf16, #tpu.memory_space<vmem>>, vector<1x16x128xbf16>
    tpu.vector_store %arg4[%c0_6, %c0_7, %c0_8], %20 {strides = array<i32>} : memref<1x16x128xbf16, #tpu.memory_space<vmem>>, vector<1x16x128xbf16>,
    return
  }
  func.func @transform_0(%arg0: i32) -> (i32, i32, i32) {
    %c0_i32 = arith.constant 0 : i32
    %c0_i32_0 = arith.constant 0 : i32
    %c0_i32_1 = arith.constant 0 : i32
    return %arg0, %c0_i32, %c0_i32_0 : i32, i32, i32
  }
  func.func @transform_1(%arg0: i32) -> (i32, i32) {
    %c0_i32 = arith.constant 0 : i32
    %c0_i32_0 = arith.constant 0 : i32
    %c0_i32_1 = arith.constant 0 : i32
    return %c0_i32, %c0_i32_0 : i32, i32
  }
  func.func @transform_2(%arg0: i32) -> (i32, i32) {
    %c0_i32 = arith.constant 0 : i32
    %c0_i32_0 = arith.constant 0 : i32
    %c0_i32_1 = arith.constant 0 : i32
    return %c0_i32, %c0_i32_0 : i32, i32
  }
  func.func @transform_3(%arg0: i32) -> (i32, i32, i32) {
    %c0_i32 = arith.constant 0 : i32
    %c0_i32_0 = arith.constant 0 : i32
    %c0_i32_1 = arith.constant 0 : i32
    return %arg0, %c0_i32, %c0_i32_0 : i32, i32, i32
  }
}

</mosaic_0001>

<llo_original>
// kernel: tpu_custom_call.1
$region0: #{tpu_custom_call.1}
  #allocation0 [shape = 'u32[]', space=smem, size = 0x4, offset = 0x4, fixed_abs, tag = 'smem constant byte address 0x4 - core index']
  #allocation1 [shape = 'u32[72,128]{1,0:T(1,128)}', space=vmem, size = 0x9000, scoped, tag = 'internal scratch']
  %s0 = inlined_call_operand.vmem [shape: bf16[2,16,4], index: 0, kind: input, shape index: {}]
  %s1 = inlined_call_operand.vmem [shape: bf16[4,384], index: 1, kind: input, shape index: {}]
  %s2 = inlined_call_operand.vmem [shape: bf16[16,128], index: 2, kind: input, shape index: {}]
  %s3 = inlined_call_operand.hbm [shape: bf16[2,16,128], index: 3, kind: output, shape index: {}]
  %s4 = sld [smem:[#allocation0]]
  $region45: #{tpu_custom_call.1} parent=0
    _
  %s6 = ssub.s32 1, %s4
  %s7 = scalar_select 0, %s6, %s4
  $region1: #{tpu_custom_call.1} parent=0
    #allocation2 [shape = 'u8[8192]{0}', space=vmem, size = 0x2000, scoped, tag = 'output window, operand 0']
    #allocation3 [shape = 's32[2]{0}', space=sflag, size = 0x8, scoped, tag = 'scoped memory for tpu_custom_call.1']
    %8 = vsyncpa [#allocation3], 0
    %s9 = scalar_lea.sflag [#allocation3], 1
    %10 = vsyncpa %s9, 0
    loop: start=0, step=1, limit=4
    $region2: #{tpu_custom_call.1} parent=1 // loop_pre_header
      _
    $region3: #{tpu_custom_call.1} parent=1 // loop_header
      %s12 = sphi 0, %s16
      %p13 = scmp.ge.s32.totalorder %s12, 4
      %s22 = sphi 0, %s24
      %s25 = sphi 0, %s22
      %s26 = sphi 0, %s25
      %s42 = sphi 0, %s26
      %s46 = sphi 0, %s46
      %s48 = sphi 0, %s46
      %s49 = sphi 0, %s48
      %s63 = sphi 0, %s49
      %s67 = sphi 0, %s67
      %s69 = sphi 0, %s67
      %s70 = sphi 0, %s69
      %s84 = sphi 0, %s70
      %s90 = sphi 0, %s92
      %s93 = sphi 0, %s90
      %s94 = sphi 0, %s93
      %s110 = sphi 0, %s94
    $region4: #{tpu_custom_call.1} parent=1 // loop_header_branch
      %15 = sbr.rel (%p13) target = $region8
    $region5: #{tpu_custom_call.1} parent=1 // loop_body
      %s17 = ssub.s32 %s12, 1
      %s18 = ssub.s32 %s12, 2
      %s19 = sadd.s32 %s12, 1
      %s20 = ssub.s32 %s12, %s19
      %p21 = scmp.eq.s32.totalorder %s20, 0
      %s23 = sadd.s32 %s22, 1
      %s24 = scalar_select %p21, %s22, %s23
      %p27 = pneg %p21
      %p28 = scmp.eq.s32.totalorder %s12, 1
      %p29 = por %p27, %p28
      %p30 = scmp.ne.s32.totalorder %s22, %s25
      %p31 = scmp.eq.s32.totalorder %s12, 0
      %p32 = por %p30, %p31
      %p33 = scmp.ne.s32.totalorder %s22, %s25
      %p34 = scmp.eq.s32.totalorder %s17, 1
      %p35 = por %p33, %p34
      %p36 = scmp.ne.s32.totalorder %s25, %s26
      %p37 = scmp.eq.s32.totalorder %s17, 0
      %p38 = por %p36, %p37
      %p39 = scmp.ne.s32.totalorder %s25, %s26
      %p40 = scmp.eq.s32.totalorder %s18, 1
      %p41 = por %p39, %p40
      %p43 = scmp.ne.s32.totalorder %s26, %s42
      %p44 = scmp.eq.s32.totalorder %s18, 0
      %p45 = por %p43, %p44
      %s47 = sadd.s32 %s46, 1
      %p50 = scmp.eq.s32.totalorder %s12, 1
      %p51 = scmp.ne.s32.totalorder %s46, %s48
      %p52 = scmp.eq.s32.totalorder %s12, 0
      %p53 = por %p51, %p52
      %p54 = scmp.ne.s32.totalorder %s46, %s48
      %p55 = scmp.eq.s32.totalorder %s17, 1
      %p56 = por %p54, %p55
      %p57 = scmp.ne.s32.totalorder %s48, %s49
      %p58 = scmp.eq.s32.totalorder %s17, 0
      %p59 = por %p57, %p58
      %p60 = scmp.ne.s32.totalorder %s48, %s49
      %p61 = scmp.eq.s32.totalorder %s18, 1
      %p62 = por %p60, %p61
      %p64 = scmp.ne.s32.totalorder %s49, %s63
      %p65 = scmp.eq.s32.totalorder %s18, 0
      %p66 = por %p64, %p65
      %s68 = sadd.s32 %s67, 1
      %p71 = scmp.eq.s32.totalorder %s12, 1
      %p72 = scmp.ne.s32.totalorder %s67, %s69
      %p73 = scmp.eq.s32.totalorder %s12, 0
      %p74 = por %p72, %p73
      %p75 = scmp.ne.s32.totalorder %s67, %s69
      %p76 = scmp.eq.s32.totalorder %s17, 1
      %p77 = por %p75, %p76
      %p78 = scmp.ne.s32.totalorder %s69, %s70
      %p79 = scmp.eq.s32.totalorder %s17, 0
      %p80 = por %p78, %p79
      %p81 = scmp.ne.s32.totalorder %s69, %s70
      %p82 = scmp.eq.s32.totalorder %s18, 1
      %p83 = por %p81, %p82
      %p85 = scmp.ne.s32.totalorder %s70, %s84
      %p86 = scmp.eq.s32.totalorder %s18, 0
      %p87 = por %p85, %p86
      %s88 = ssub.s32 %s12, %s19
      %p89 = scmp.eq.s32.totalorder %s88, 0
      %s91 = sadd.s32 %s90, 1
      %s92 = scalar_select %p89, %s90, %s91
      %p95 = pneg %p89
      %p96 = scmp.eq.s32.totalorder %s12, 1
      %p97 = por %p95, %p96
      %p98 = scmp.ne.s32.totalorder %s90, %s93
      %p99 = scmp.eq.s32.totalorder %s12, 0
      %p100 = por %p98, %p99
      %p101 = scmp.ne.s32.totalorder %s90, %s93
      %p102 = scmp.eq.s32.totalorder %s17, 1
      %p103 = por %p101, %p102
      %p104 = scmp.ne.s32.totalorder %s93, %s94
      %p105 = scmp.eq.s32.totalorder %s17, 0
      %p106 = por %p104, %p105
      %p107 = scmp.ne.s32.totalorder %s93, %s94
      %p108 = scmp.eq.s32.totalorder %s18, 1
      %p109 = por %p107, %p108
      %p111 = scmp.ne.s32.totalorder %s94, %s110
      %p112 = scmp.eq.s32.totalorder %s18, 0
      %p113 = por %p111, %p112
      %p114 = scmp.le.s32.totalorder 1, %s12
      %p115 = scmp.lt.s32.totalorder %s12, 3
      %p116 = pnand %p114, %p115
      %p117 = pneg %p116
      // Predicated region
      $region9: #{tpu_custom_call.1} parent=5 // pred_check
        _
      $region10: #{tpu_custom_call.1} parent=5 // pred_check_branch
        %119 = sbr.rel (%p116) target = $region12
      $region11: #{tpu_custom_call.1} parent=5 // pred_region
        %s120 = ssub.s32 %s12, 1
        // Predicated region
        $region13: #{tpu_custom_call.1} parent=11 // pred_check
          %p121 = pneg %p59
        $region14: #{tpu_custom_call.1} parent=11 // pred_check_branch
          %123 = sbr.rel (%p121) target = $region16
        $region15: #{tpu_custom_call.1} parent=11 // pred_region
          _
        $region16: #{tpu_custom_call.1} parent=11 // pred_fallthru
          _
        // Predicated region
        $region17: #{tpu_custom_call.1} parent=11 // pred_check
          %p124 = pneg %p80
        $region18: #{tpu_custom_call.1} parent=11 // pred_check_branch
          %126 = sbr.rel (%p124) target = $region20
        $region19: #{tpu_custom_call.1} parent=11 // pred_region
          _
        $region20: #{tpu_custom_call.1} parent=11 // pred_fallthru
          _
      $region12: #{tpu_custom_call.1} parent=5 // pred_fallthru
        _
      %p127 = scmp.lt.s32.totalorder %s12, 2
      // Predicated region
      $region21: #{tpu_custom_call.1} parent=5 // pred_check
        %p128 = pneg %p127
      $region22: #{tpu_custom_call.1} parent=5 // pred_check_branch
        %130 = sbr.rel (%p128) target = $region24
      $region23: #{tpu_custom_call.1} parent=5 // pred_region
        // Predicated region
        $region25: #{tpu_custom_call.1} parent=23 // pred_check
          %p131 = pneg %p32
        $region26: #{tpu_custom_call.1} parent=23 // pred_check_branch
          %133 = sbr.rel (%p131) target = $region28
        $region27: #{tpu_custom_call.1} parent=23 // pred_region
          %p134 = scmp.lt.s32.totalorder %s12, 1
          %s135 = scalar_select %p134, %s12, 1
          %s136 = smul.addr %s135, 2
          %s137 = smul.addr %s136, 4
          %s138 = scalar_lea.vmem %s0, %s137
        $region28: #{tpu_custom_call.1} parent=23 // pred_fallthru
          _
      $region24: #{tpu_custom_call.1} parent=5 // pred_fallthru
        _
      %p139 = scmp.le.s32.totalorder 1, %s12
      %p140 = scmp.lt.s32.totalorder %s12, 3
      %p141 = pnand %p139, %p140
      %p142 = pneg %p141
      // Predicated region
      $region29: #{tpu_custom_call.1} parent=5 // pred_check
        _
      $region30: #{tpu_custom_call.1} parent=5 // pred_check_branch
        %144 = sbr.rel (%p141) target = $region32
      $region31: #{tpu_custom_call.1} parent=5 // pred_region
        %s145 = ssub.s32 %s12, 1
        %p146 = scmp.lt.s32.totalorder %s17, 1
        %s147 = scalar_select %p146, %s17, 1
        %s148 = smul.addr %s147, 2
        %s149 = smul.addr %s148, 4
        %s150 = scalar_lea.vmem %s0, %s149
        %p151 = pneg %p38
        %p152 = pneg %p35
        %p153 = pneg %p59
        %p154 = pneg %p56
        %p155 = pneg %p80
        %p156 = pneg %p77
        %p157 = pneg %p106
        %p158 = pneg %p103
        %s159 = sand.u32 %s93, 1
        %s160 = scalar_lea.sflag [#allocation3], %s159
        %s161 = sand.u32 %s93, 1
        %s162 = smul.addr %s161, 8
        %s163 = scalar_lea.vmem [#allocation2], %s162
        %p164 = scmp.lt.s32.totalorder %s17, 1
        %s165 = scalar_select %p164, %s17, 1
        %s166 = smul.addr %s165, 2
        %s167 = smul.addr %s166, 4
        %s168 = scalar_lea.vmem %s0, %s167
        %v170 = vld [vmem:[%s168] sm:$0xf]
        %v171 = vld [vmem:[%s168 + $0x4] sm:$0xf]
        %v172 = vld [vmem:[%s1] sm:$0x3f]
        %v175 = vunpack.c.l.b16 %v170
        %v176 = vunpack.c.l.b16 %v171
        %v177 = vpack.c.b16 %v176, %v175
        %179 = vst [vmem:[#allocation1] ss:$4 sm:$0xff] %v172
        %v180 = vld.sshfl [vmem:[#allocation1] sm:$0xff pattern:$0x73625140]
        %v181 = vld.sshfl [vmem:[#allocation1 + $0x8] sm:$0xff pattern:$0x73625140]
        %v182 = vld.sshfl [vmem:[#allocation1 + $0x10] sm:$0xff pattern:$0x73625140]
        %vm183 = vcmask 31744
        %v185 = vsel %vm183, %v177, 0
        %vm187 = vcmask 1041408
        %v188 = vsel %vm187, %v180, 0
        %v190 = vsel %vm187, %v181, 0
        %v192 = vsel %vm187, %v182, 0
        %194 = vmatpush.bf16.msra.mxu0 0
        %195 = vmatpush.bf16.msra.mxu0 0
        %196 = vmatpush.bf16.msra.mxu0 0
        %197 = vmatpush.bf16.msra.mxu0 0
        %198 = vmatpush.bf16.msra.mxu0 0
        %199 = vmatpush.bf16.msra.mxu0 0
        %200 = vmatpush.bf16.msra.mxu0 0
        %201 = vmatpush.bf16.msra.mxu0 %v188
        %202 = vmatmul.bf16.gmra.mxu0 %v185
        %v203 = vpop.f32.mrf.mxu0
        %v204 = vadd.f32 0.0, %v203
        %v205 = vpop.f32.mrf.mxu0
        %v206 = vadd.f32 0.0, %v205
        %207 = vdwg.mxu0
        %208 = vmatpush.bf16.msra.mxu0 0
        %209 = vmatpush.bf16.msra.mxu0 0
        %210 = vmatpush.bf16.msra.mxu0 0
        %211 = vmatpush.bf16.msra.mxu0 0
        %212 = vmatpush.bf16.msra.mxu0 0
        %213 = vmatpush.bf16.msra.mxu0 0
        %214 = vmatpush.bf16.msra.mxu0 0
        %215 = vmatpush.bf16.msra.mxu0 %v190
        %216 = vmatmul.bf16.gmra.mxu0 %v185
        %v217 = vpop.f32.mrf.mxu0
        %v218 = vadd.f32 0.0, %v217
        %v219 = vpop.f32.mrf.mxu0
        %v220 = vadd.f32 0.0, %v219
        %221 = vdwg.mxu0
        %222 = vmatpush.bf16.msra.mxu0 0
        %223 = vmatpush.bf16.msra.mxu0 0
        %224 = vmatpush.bf16.msra.mxu0 0
        %225 = vmatpush.bf16.msra.mxu0 0
        %226 = vmatpush.bf16.msra.mxu0 0
        %227 = vmatpush.bf16.msra.mxu0 0
        %228 = vmatpush.bf16.msra.mxu0 0
        %229 = vmatpush.bf16.msra.mxu0 %v192
        %230 = vmatmul.bf16.gmra.mxu0 %v185
        %v231 = vpop.f32.mrf.mxu0
        %v232 = vadd.f32 0.0, %v231
        %v233 = vpop.f32.mrf.mxu0
        %v234 = vadd.f32 0.0, %v233
        %235 = vdwg.mxu0
        %v237 = vrot.slane %v206, 7
        %vm240 = vcmask 1040384
        %v241 = vrot.slane %v204, 7
        %v242 = vsel %vm240, %v241, %v237
        %v245 = vsel %vm240, %v237, %v241
        %v246 = vadd.f32 %v245, %v218
        %v247 = vadd.f32 %v242, %v220
        %vm250 = vcmask 1046528
        %v251 = vrot.slane %v232, 1
        %v252 = vrot.slane %v234, 1
        %v253 = vsel %vm250, %v251, %v252
        %v257 = vsel %vm250, %v252, %v251
        %v258 = vadd.f32 %v246, %v253
        %v259 = vadd.f32 %v247, %v257
        %v260 = vld [vmem:[%s2] sm:$0xf]
        %v261 = vld [vmem:[%s2 + $0x4] sm:$0xf]
        %v262 = vunpack.c.l.bf16 %v260
        %v263 = vunpack.c.l.bf16 %v261
        %v264 = vadd.f32 %v258, %v262
        %v265 = vadd.f32 %v259, %v263
        %v266 = vpack.c.bf16 %v264, %v264
        %v267 = vpack.c.bf16 %v265, %v265
        %268 = vst [vmem:[%s163] sm:$0xf] %v266
        %269 = vst [vmem:[%s163 + $0x4] sm:$0xf] %v267
        %s270 = sand.u32 %s93, 1
        %s271 = scalar_lea.sflag [#allocation3], %s270
        %s272 = sand.u32 %s93, 1
        %s273 = smul.addr %s272, 8
        %s274 = scalar_lea.vmem [#allocation2], %s273
        // Predicated region
        $region33: #{tpu_custom_call.1} parent=31 // pred_check
          %p275 = pneg %p103
        $region34: #{tpu_custom_call.1} parent=31 // pred_check_branch
          %277 = sbr.rel (%p275) target = $region36
        $region35: #{tpu_custom_call.1} parent=31 // pred_region
          %279 = vsyncadd %s271, 0
          %s280 = smul.addr %s17, 2
          %s281 = smul.addr %s280, 4
          %s282 = scalar_lea.hbm %s3, %s281
          %s283 = sshll.u32 %s274, 4
          %s284 = int_to_ptr.vmem [resolvable:$true] %s283
          %s285 = sshll.u32 %s282, 4
          %s286 = int_to_ptr.hbm [resolvable:$true] %s285
          %291 = dma.vmem_to_hbm [thread:$0]  %s284, 128, %s286, %s271, 64, 64, 4
        $region36: #{tpu_custom_call.1} parent=31 // pred_fallthru
          _
      $region32: #{tpu_custom_call.1} parent=5 // pred_fallthru
        _
      %p292 = scmp.le.s32.totalorder 2, %s12
      // Predicated region
      $region37: #{tpu_custom_call.1} parent=5 // pred_check
        %p293 = pneg %p292
      $region38: #{tpu_custom_call.1} parent=5 // pred_check_branch
        %295 = sbr.rel (%p293) target = $region40
      $region39: #{tpu_custom_call.1} parent=5 // pred_region
        %s296 = ssub.s32 %s12, 2
        // Predicated region
        $region41: #{tpu_custom_call.1} parent=39 // pred_check
          %p297 = pneg %p109
        $region42: #{tpu_custom_call.1} parent=39 // pred_check_branch
          %299 = sbr.rel (%p297) target = $region44
        $region43: #{tpu_custom_call.1} parent=39 // pred_region
          %s300 = sand.u32 %s94, 1
          %s301 = scalar_lea.sflag [#allocation3], %s300
          %s302 = sand.u32 %s94, 1
          %s303 = smul.addr %s302, 8
          %s304 = scalar_lea.vmem [#allocation2], %s303
          %306 = dma.done %s301, 128
        $region44: #{tpu_custom_call.1} parent=39 // pred_fallthru
          _
      $region40: #{tpu_custom_call.1} parent=5 // pred_fallthru
        _
    $region6: #{tpu_custom_call.1} parent=1 // loop_footer
      %s16 = sadd.s32 1, %s12
    $region7: #{tpu_custom_call.1} parent=1 // loop_footer_branch
      %11 = sbr.rel target = $region3
    $region8: #{tpu_custom_call.1} parent=1 // loop_exit
      _
    %307 = vsyncpa [#allocation3], 1
    %s308 = scalar_lea.sflag [#allocation3], 1
    %309 = vsyncpa %s308, 1

</llo_original>
